<compile_context>
chip_gen: v6e
topology: v6e:2x2x1
jax: 0.10.0
libtpu: 0.0.40
codegen_flags: <defaults>
</compile_context>

<pallas_src>
import functools

import jax
import jax.numpy as jnp
import numpy as np
from jax import lax
from jax.experimental import pallas as pl
from jax.experimental.pallas import tpu as pltpu


# ----------------------------- device helpers -------------------------------

def _device_kind():
    try:
        return jax.devices()[0].device_kind.lower()
    except Exception:
        return ""


def _default_recurrence_mode():
    k = _device_kind()
    # v4 / v7x have 2 TensorCores per chip -> run the two GRU directions on separate
    # cores via a "parallel" grid axis.  Single-TC chips (v5e/v6e) are better served by
    # fusing both directions into one block-diagonal W_hh matmul per step.
    if "v4" in k or "7" in k:
        return "split"
    return "fused"


def _vmem_limit_bytes():
    k = _device_kind()
    if "v5" in k or "v6" in k:        # 128 MiB physical VMEM
        return 96 * 1024 * 1024
    return 48 * 1024 * 1024           # v7x has only 64 MiB / TC; stay well under


def _pick_time_chunk(T):
    # Tc must keep the epilogue's (B, Tc, H) output block sublane-aligned:
    # a divisor of T that is a multiple of 8, else fall back to the full T.
    for c in (32, 16, 8):
        if T % c == 0:
            return c
    return T


def _round_up(x, m):
    return -(-x // m) * m


def _pad_to(a, shape):
    pads = [(0, s - d) for d, s in zip(a.shape, shape)]
    if all(p == (0, 0) for p in pads):
        return a
    return jnp.pad(a, pads)


# ----------------------------- Pallas kernels -------------------------------

def _proj_kernel(x_ref, w_ref, b_ref, o_ref, acc_ref):
    # x: (tm, tk) bf16, w: (tk, tn) bf16, b: (1, tn) f32 -> o: (tm, tn) bf16.
    # K is the last grid axis; f32 accumulator in VMEM scratch.
    @pl.when(pl.program_id(3) == 0)
    def _():
        acc_ref[...] = jnp.zeros_like(acc_ref)

    acc_ref[...] += jnp.dot(x_ref[...], w_ref[...],
                            preferred_element_type=jnp.float32)

    @pl.when(pl.program_id(3) == pl.num_programs(3) - 1)
    def _():
        o_ref[...] = (acc_ref[...] + b_ref[...]).astype(o_ref.dtype)


def _gru_split_chunk_kernel(xp_ref, whh_ref, bhh_ref, len_ref, out_ref, h_ref,
                            *, Tc, H, T):
    # Grid = (direction, T // Tc).  One direction per grid row ("parallel" -> own TC on
    # multi-core chips).  Per grid step: Tc local GRU steps, h carried in VMEM scratch.
    d = pl.program_id(0)
    tc = pl.program_id(1)

    @pl.when(tc == 0)
    def _():
        h_ref[...] = jnp.zeros_like(h_ref)

    whh = whh_ref[...]              # (H, 3H) f32, resident (constant block index)
    bhh = bhh_ref[...]              # (1, 3H)
    lens = len_ref[...]             # (B, 1) int32

    def step(i, h):
        li = i + d * (Tc - 1 - 2 * i)          # local slot inside this chunk
        s = tc * Tc + i                        # processing-order step counter
        tpos = s + d * (T - 1 - 2 * s)         # actual sequence position
        xp = xp_ref[pl.ds(li, 1), :, :][0].astype(jnp.float32)        # (B, 3H)
        hp = jnp.dot(h, whh, preferred_element_type=jnp.float32,
                     precision=lax.Precision.HIGHEST) + bhh
        r = jax.nn.sigmoid(xp[:, 0:H] + hp[:, 0:H])
        z = jax.nn.sigmoid(xp[:, H:2 * H] + hp[:, H:2 * H])
        n = jnp.tanh(xp[:, 2 * H:] + r * hp[:, 2 * H:])
        h_new = (1.0 - z) * n + z * h
        valid = tpos < lens                    # (B, 1) packed-sequence gating
        out_ref[pl.ds(li, 1), :, :] = (
            jnp.where(valid, h_new, 0.0).astype(out_ref.dtype)[None])
        return jnp.where(valid, h_new, h)

    h_ref[...] = lax.fori_loop(0, Tc, step, h_ref[...], unroll=True)


def _gru_fused_chunk_kernel(xpf_ref, xpb_ref, whh_ref, bhh_ref, len_ref,
                            outf_ref, outb_ref, h_ref, *, Tc, H, T):
    # Grid = (T // Tc,).  Both directions advance together: h = [h_fwd | h_bwd] (B,2H),
    # W_hh is block-diagonal (2H, 6H), so one MXU matmul drives both recurrences.
    tc = pl.program_id(0)

    @pl.when(tc == 0)
    def _():
        h_ref[...] = jnp.zeros_like(h_ref)

    whh = whh_ref[...]              # (2H, 6H) block-diagonal, f32
    bhh = bhh_ref[...]              # (1, 6H)
    lens = len_ref[...]             # (B, 1)

    def step(i, h):
        s = tc * Tc + i             # forward time position
        sb = T - 1 - s              # backward time position
        xf = xpf_ref[pl.ds(i, 1), :, :][0].astype(jnp.float32)            # (B, 3H)
        xb = xpb_ref[pl.ds(Tc - 1 - i, 1), :, :][0].astype(jnp.float32)   # (B, 3H)
        hp = jnp.dot(h, whh, preferred_element_type=jnp.float32,
                     precision=lax.Precision.HIGHEST) + bhh               # (B, 6H)
        hf, hb = h[:, 0:H], h[:, H:2 * H]
        hpf, hpb = hp[:, 0:3 * H], hp[:, 3 * H:6 * H]

        rf = jax.nn.sigmoid(xf[:, 0:H] + hpf[:, 0:H])
        zf = jax.nn.sigmoid(xf[:, H:2 * H] + hpf[:, H:2 * H])
        nf = jnp.tanh(xf[:, 2 * H:] + rf * hpf[:, 2 * H:])
        hf_new = (1.0 - zf) * nf + zf * hf

        rb = jax.nn.sigmoid(xb[:, 0:H] + hpb[:, 0:H])
        zb = jax.nn.sigmoid(xb[:, H:2 * H] + hpb[:, H:2 * H])
        nb = jnp.tanh(xb[:, 2 * H:] + rb * hpb[:, 2 * H:])
        hb_new = (1.0 - zb) * nb + zb * hb

        vf = s < lens
        vb = sb < lens
        outf_ref[pl.ds(i, 1), :, :] = (
            jnp.where(vf, hf_new, 0.0).astype(outf_ref.dtype)[None])
        outb_ref[pl.ds(Tc - 1 - i, 1), :, :] = (
            jnp.where(vb, hb_new, 0.0).astype(outb_ref.dtype)[None])
        return jnp.concatenate(
            [jnp.where(vf, hf_new, hf), jnp.where(vb, hb_new, hb)], axis=-1)

    h_ref[...] = lax.fori_loop(0, Tc, step, h_ref[...], unroll=True)


def _avg_norm_kernel(f_ref, b_ref, o_ref, *, do_norm):
    # cap_emb = (fwd + bwd) / 2, optional L2 norm; batch-first write (no XLA transpose).
    f = f_ref[...].astype(jnp.float32)
    b = b_ref[...].astype(jnp.float32)
    avg = (f + b) * 0.5                            # (Tc, B, H)
    if do_norm:
        s = jnp.sum(avg * avg, axis=-1, keepdims=True)
        avg = avg * lax.rsqrt(s + 1e-16)           # EUP rsqrt; all-zero padded rows stay 0
    Tc = avg.shape[0]
    for i in range(Tc):                            # per-timestep sublane stores into (B, Tc, H)
        o_ref[:, pl.ds(i, 1), :] = avg[i].astype(o_ref.dtype)[:, None, :]


# ------------------------------ JAX wrappers ---------------------------------

def _input_projection(x2d, w_stack, b_stack, *, tm=512, tn=512, tk=1024):
    """(M, Din) bf16 x (2, Din, 3H) bf16 + (2, 1, 3H) f32 -> (2, M, 3H) bf16."""
    M, K = x2d.shape
    _, _, N = w_stack.shape
    tm, tn, tk = min(tm, M), min(tn, N), min(tk, K)
    Mp, Np, Kp = _round_up(M, tm), _round_up(N, tn), _round_up(K, tk)
    x_p = _pad_to(x2d, (Mp, Kp))
    w_p = _pad_to(w_stack, (2, Kp, Np))
    b_p = _pad_to(b_stack, (2, 1, Np))

    out = pl.pallas_call(
        _proj_kernel,
        out_shape=jax.ShapeDtypeStruct((2, Mp, Np), jnp.bfloat16),
        grid_spec=pltpu.PrefetchScalarGridSpec(
            num_scalar_prefetch=0,
            grid=(2, Mp // tm, Np // tn, Kp // tk),
            in_specs=[
                pl.BlockSpec((tm, tk), lambda d, m, n, k: (m, k)),
                pl.BlockSpec((None, tk, tn), lambda d, m, n, k: (d, k, n)),
                pl.BlockSpec((None, 1, tn), lambda d, m, n, k: (d, 0, n)),
            ],
            out_specs=pl.BlockSpec((None, tm, tn), lambda d, m, n, k: (d, m, n)),
            scratch_shapes=[pltpu.VMEM((tm, tn), jnp.float32)],
        ),
        compiler_params=pltpu.CompilerParams(
            dimension_semantics=("parallel", "parallel", "parallel", "arbitrary"),
            vmem_limit_bytes=_vmem_limit_bytes(),
        ),
    )(x_p, w_p, b_p)
    if (Mp, Np) != (M, N):
        out = out[:, :M, :N]
    return out


def _bigru_layer_split(xp, w_hh, b_hh, len_b1, Tc):
    """xp: (2, T, B, 3H) bf16 -> (2, T, B, H) bf16; direction axis 'parallel'."""
    _, T, B, H3 = xp.shape
    H = H3 // 3
    nT = T // Tc
    cmap = lambda d, tc: (d, tc + d * (nT - 1 - 2 * tc), 0, 0)   # fwd: tc, bwd: mirror
    return pl.pallas_call(
        functools.partial(_gru_split_chunk_kernel, Tc=Tc, H=H, T=T),
        out_shape=jax.ShapeDtypeStruct((2, T, B, H), jnp.bfloat16),
        grid_spec=pltpu.PrefetchScalarGridSpec(
            num_scalar_prefetch=0,
            grid=(2, nT),
            in_specs=[
                pl.BlockSpec((None, Tc, B, H3), cmap),
                pl.BlockSpec((None, H, H3), lambda d, tc: (d, 0, 0)),
                pl.BlockSpec((None, 1, H3), lambda d, tc: (d, 0, 0)),
                pl.BlockSpec((B, 1), lambda d, tc: (0, 0)),
            ],
            out_specs=pl.BlockSpec((None, Tc, B, H), cmap),
            scratch_shapes=[pltpu.VMEM((B, H), jnp.float32)],
        ),
        compiler_params=pltpu.CompilerParams(
            dimension_semantics=("parallel", "arbitrary"),
            vmem_limit_bytes=_vmem_limit_bytes(),
        ),
    )(xp, w_hh, b_hh, len_b1)


def _bigru_layer_fused(xp, whh_c, bhh_c, len_b1, Tc):
    """xp: (2, T, B, 3H) bf16 -> (fwd, bwd) each (T, B, H) bf16; one step drives both dirs."""
    _, T, B, H3 = xp.shape
    H = H3 // 3
    nT = T // Tc
    out_sds = jax.ShapeDtypeStruct((T, B, H), jnp.bfloat16)
    return pl.pallas_call(
        functools.partial(_gru_fused_chunk_kernel, Tc=Tc, H=H, T=T),
        out_shape=(out_sds, out_sds),
        grid_spec=pltpu.PrefetchScalarGridSpec(
            num_scalar_prefetch=0,
            grid=(nT,),
            in_specs=[
                # xp passed twice but the two blocks are direction-disjoint slices,
                # so every byte of xp is streamed exactly once.
                pl.BlockSpec((None, Tc, B, H3), lambda tc: (0, tc, 0, 0)),
                pl.BlockSpec((None, Tc, B, H3), lambda tc: (1, nT - 1 - tc, 0, 0)),
                pl.BlockSpec((2 * H, 6 * H), lambda tc: (0, 0)),
                pl.BlockSpec((1, 6 * H), lambda tc: (0, 0)),
                pl.BlockSpec((B, 1), lambda tc: (0, 0)),
            ],
            out_specs=[
                pl.BlockSpec((Tc, B, H), lambda tc: (tc, 0, 0)),
                pl.BlockSpec((Tc, B, H), lambda tc: (nT - 1 - tc, 0, 0)),
            ],
            scratch_shapes=[pltpu.VMEM((B, 2 * H), jnp.float32)],
        ),
        compiler_params=pltpu.CompilerParams(
            dimension_semantics=("arbitrary",),
            vmem_limit_bytes=_vmem_limit_bytes(),
        ),
    )(xp, xp, whh_c, bhh_c, len_b1)


def _avg_l2norm(dir_out, *, do_norm, Tc):
    if isinstance(dir_out, tuple):            # fused path: two (T, B, H) arrays
        f, b = dir_out
        T, B, H = f.shape
        in_specs = [pl.BlockSpec((Tc, B, H), lambda t: (t, 0, 0)),
                    pl.BlockSpec((Tc, B, H), lambda t: (t, 0, 0))]
        operands = (f, b)
    else:                                     # split path: one (2, T, B, H) array
        _, T, B, H = dir_out.shape
        # Same array passed twice but with direction-disjoint blocks -> single stream
        # of every byte of rnn_out, one kernel body shared with the fused path.
        in_specs = [pl.BlockSpec((None, Tc, B, H), lambda t: (0, t, 0, 0)),
                    pl.BlockSpec((None, Tc, B, H), lambda t: (1, t, 0, 0))]
        operands = (dir_out, dir_out)
    return pl.pallas_call(
        functools.partial(_avg_norm_kernel, do_norm=do_norm),
        out_shape=jax.ShapeDtypeStruct((B, T, H), jnp.float32),
        grid_spec=pltpu.PrefetchScalarGridSpec(
            num_scalar_prefetch=0,
            grid=(T // Tc,),
            in_specs=in_specs,
            out_specs=pl.BlockSpec((B, Tc, H), lambda t: (0, t, 0)),
        ),
        compiler_params=pltpu.CompilerParams(dimension_semantics=("parallel",)),
    )(*operands)


# --------------------------- parameter preparation ---------------------------

def prepare_params(params):
    """One-time packing: transpose/stack GRU weights, build the block-diag W_hh for the
    fused path, and cast streamed tensors to bf16 (done once, not per forward call)."""
    prep = {"embed": params["embed"].astype(jnp.bfloat16), "layers": []}
    for (p_f, p_b) in params["gru_layers"]:
        H = p_f["w_hh"].shape[1]
        w_ih = jnp.stack([p_f["w_ih"].T, p_b["w_ih"].T]).astype(jnp.bfloat16)     # (2,Din,3H)
        b_ih = jnp.stack([p_f["b_ih"][None], p_b["b_ih"][None]]).astype(jnp.float32)
        w_hh = jnp.stack([p_f["w_hh"].T, p_b["w_hh"].T]).astype(jnp.float32)      # (2,H,3H)
        b_hh = jnp.stack([p_f["b_hh"][None], p_b["b_hh"][None]]).astype(jnp.float32)
        whh_c = jnp.zeros((2 * H, 6 * H), jnp.float32)
        whh_c = whh_c.at[:H, :3 * H].set(p_f["w_hh"].T.astype(jnp.float32))
        whh_c = whh_c.at[H:, 3 * H:].set(p_b["w_hh"].T.astype(jnp.float32))
        bhh_c = jnp.concatenate([p_f["b_hh"], p_b["b_hh"]]).astype(jnp.float32)[None]
        prep["layers"].append(dict(w_ih=w_ih, b_ih=b_ih, w_hh=w_hh, b_hh=b_hh,
                                   whh_c=whh_c, bhh_c=bhh_c))
    return prep


# --------------------------------- forward -----------------------------------

def encoder_text_bigru_forward(prep, x_ids, lengths, no_txtnorm=False, mode=None):
    """Mirrors EncoderTextBigru.forward (self.fc is unused there as well)."""
    if mode is None:
        mode = _default_recurrence_mode()
    # Embedding gather straight into time-major bf16 (T, B, D).
    # TODO(synk): fuse this gather into the projection via scalar-prefetched ids +
    # pl.Element row-gather on the LHS BlockSpec to skip one HBM round trip.
    emb_tm = jnp.take(prep["embed"], x_ids.T, axis=0)           # (T, B, D) bf16
    T, B, _ = emb_tm.shape
    lengths_b1 = lengths.astype(jnp.int32).reshape(B, 1)
    Tc = _pick_time_chunk(T)

    layer_in = emb_tm
    dir_out = None
    for li, lp in enumerate(prep["layers"]):
        d_in = layer_in.shape[-1]
        xp = _input_projection(layer_in.reshape(T * B, d_in), lp["w_ih"], lp["b_ih"])
        xp = xp.reshape(2, T, B, -1)                             # stays time-major
        if mode == "split":
            dir_out = _bigru_layer_split(xp, lp["w_hh"], lp["b_hh"], lengths_b1, Tc)
        else:
            dir_out = _bigru_layer_fused(xp, lp["whh_c"], lp["bhh_c"], lengths_b1, Tc)
        if li + 1 < len(prep["layers"]):
            # TODO(synk): fold this concat into the next layer's projection by splitting
            # W_ih's input rows (fwd/bwd halves) instead of materialising (T,B,2H).
            layer_in = jnp.concatenate([dir_out[0], dir_out[1]], axis=-1)

    return _avg_l2norm(dir_out, do_norm=not no_txtnorm, Tc=Tc)   # (B, T, H) f32


# ------------------------------ parameters ------------------------------------

def init_params(key, vocab_size, word_dim, embed_size, num_layers):
    H = embed_size
    n_keys = 2 + num_layers * 2 * 4
    ks = iter(jax.random.split(key, n_keys))
    params = {
        "embed": jax.random.normal(next(ks), (vocab_size, word_dim),
                                   jnp.float32) * 0.1,
    }
    bound = 1.0 / float(np.sqrt(H))
    layers = []
    for l in range(num_layers):
        d_in = word_dim if l == 0 else 2 * H
        dirs = []
        for _ in range(2):  # forward / backward direction
            dirs.append({
                "w_ih": jax.random.uniform(next(ks), (3 * H, d_in),
                                           minval=-bound, maxval=bound),
                "w_hh": jax.random.uniform(next(ks), (3 * H, H),
                                           minval=-bound, maxval=bound),
                "b_ih": jax.random.uniform(next(ks), (3 * H,),
                                           minval=-bound, maxval=bound),
                "b_hh": jax.random.uniform(next(ks), (3 * H,),
                                           minval=-bound, maxval=bound),
            })
        layers.append(tuple(dirs))
    params["gru_layers"] = tuple(layers)
    # self.fc exists in __init__ but is never used in forward; kept for parity.
    params["fc_w"] = jax.random.normal(next(ks), (embed_size, embed_size)) * 0.02
    params["fc_b"] = jnp.zeros((embed_size,), jnp.float32)
    return params


# ------------------------------ reference -------------------------------------

def reference_forward(params, x_ids, lengths, no_txtnorm=False):
    emb = np.asarray(params["embed"])[np.asarray(x_ids)].astype(np.float32)
    lengths = np.asarray(lengths)
    B, T, _ = emb.shape
    layer_in = emb
    dir_outs = None
    for layer in params["gru_layers"]:
        dir_outs = []
        for d, p in enumerate(layer):
            w_ih = np.asarray(p["w_ih"]); w_hh = np.asarray(p["w_hh"])
            b_ih = np.asarray(p["b_ih"]); b_hh = np.asarray(p["b_hh"])
            H = w_hh.shape[1]
            out = np.zeros((B, T, H), np.float32)
            for b in range(B):
                L = int(lengths[b])
                h = np.zeros((H,), np.float32)
                ts = range(L - 1, -1, -1) if d == 1 else range(L)
                for t in ts:
                    gi = w_ih @ layer_in[b, t] + b_ih
                    gh = w_hh @ h + b_hh
                    r = 1.0 / (1.0 + np.exp(-(gi[:H] + gh[:H])))
                    z = 1.0 / (1.0 + np.exp(-(gi[H:2 * H] + gh[H:2 * H])))
                    n = np.tanh(gi[2 * H:] + r * gh[2 * H:])
                    h = (1.0 - z) * n + z * h
                    out[b, t] = h
            dir_outs.append(out)
        layer_in = np.concatenate(dir_outs, axis=-1)
    fwd, bwd = dir_outs
    avg = (fwd + bwd) / 2.0
    if not no_txtnorm:
        norm = np.sqrt(np.sum(avg * avg, axis=-1, keepdims=True)) + 1e-8
        avg = avg / norm
    return avg


# --------------------------------- main ----------------------------------------

if __name__ == "__main__":
    vocab_size, word_dim, embed_size, num_layers = 100, 32, 32, 1
    B, T = 2, 8

    key = jax.random.PRNGKey(0)
    pk, xk = jax.random.split(key)
    params = init_params(pk, vocab_size, word_dim, embed_size, num_layers)
    prep = prepare_params(params)
    x_ids = jax.random.randint(xk, (B, T), 0, vocab_size, dtype=jnp.int32)
    # pack_padded_sequence default requires sorted (decreasing) lengths.
    lengths = jnp.array([8, 5], dtype=jnp.int32)

    ref = reference_forward(params, x_ids, lengths)

    # Exercise BOTH recurrence code paths (fused block-diag for single-TC v5e/v6e,
    # direction-split "parallel" for multi-TC v4/v7x) regardless of the sandbox chip.
    for m in ("fused", "split"):
        cap_emb = encoder_text_bigru_forward(prep, x_ids, lengths, mode=m)
        cap_emb = jax.block_until_ready(cap_emb)
        assert cap_emb.shape == (B, T, embed_size)
        # Tolerance reflects bf16 streaming of activations/weights (MXU already
        # computes in bf16 at default precision for the feed-forward projection).
        np.testing.assert_allclose(np.asarray(cap_emb), ref, atol=2e-2, rtol=2e-2)

    # And once with automatic device-based path selection (the normal caller path).
    cap_emb = jax.block_until_ready(encoder_text_bigru_forward(prep, x_ids, lengths))
    np.testing.assert_allclose(np.asarray(cap_emb), ref, atol=2e-2, rtol=2e-2)
    print("KERNEL_OK")
</pallas_src>

<mosaic_0001>
module attributes {stable_mosaic.version = 11 : i64} {
  func.func @_proj_kernel(%arg0: i32, %arg1: i32, %arg2: i32, %arg3: i32, %arg4: memref<16x32xbf16, #tpu.memory_space<vmem>>, %arg5: memref<1x32x96xbf16, #tpu.memory_space<vmem>>, %arg6: memref<1x1x96xf32, #tpu.memory_space<vmem>>, %arg7: memref<1x16x96xbf16, #tpu.memory_space<vmem>>, %arg8: memref<16x96xf32, #tpu.memory_space<vmem>>) attributes {dimension_semantics = [#tpu.dimension_semantics<parallel>, #tpu.dimension_semantics<parallel>, #tpu.dimension_semantics<parallel>, #tpu.dimension_semantics<arbitrary>], iteration_bounds = array<i64: 2, 1, 1, 1>, scalar_prefetch = 0 : i64, scratch_operands = 1 : i64, tpu.core_type = #tpu.core_type<tc>, window_params = [{transform_indices = @transform_0, window_bounds = array<i64: 16, 32>}, {transform_indices = @transform_1, window_bounds = array<i64: 1, 32, 96>}, {transform_indices = @transform_2, window_bounds = array<i64: 1, 1, 96>}, {transform_indices = @transform_3, window_bounds = array<i64: 1, 16, 96>}]} {
    %c0_i32 = arith.constant 0 : i32
    %0 = arith.cmpi eq, %arg3, %c0_i32 : i32
    %1 = arith.extui %0 : i1 to i32
    %c0_i32_0 = arith.constant 0 : i32
    %2 = arith.cmpi ne, %1, %c0_i32_0 : i32
    scf.if %2 {
      %cst_11 = arith.constant 0.000000e+00 : f32
      %13 = vector.broadcast %cst_11 : f32 to vector<16x96xf32>
      %c0_12 = arith.constant 0 : index
      %c0_13 = arith.constant 0 : index
      %14 = vector.load %arg8[%c0_12, %c0_13] : memref<16x96xf32, #tpu.memory_space<vmem>>, vector<16x96xf32>
      tpu.vector_store %arg8[%c0_12, %c0_13], %13 {strides = array<i32>} : memref<16x96xf32, #tpu.memory_space<vmem>>, vector<16x96xf32>,
    } else {
    }
    %c0 = arith.constant 0 : index
    %c0_1 = arith.constant 0 : index
    %3 = vector.load %arg8[%c0, %c0_1] : memref<16x96xf32, #tpu.memory_space<vmem>>, vector<16x96xf32>
    %c0_2 = arith.constant 0 : index
    %c0_3 = arith.constant 0 : index
    %4 = vector.load %arg4[%c0_2, %c0_3] : memref<16x32xbf16, #tpu.memory_space<vmem>>, vector<16x32xbf16>
    %c0_4 = arith.constant 0 : index
    %c0_5 = arith.constant 0 : index
    %c0_6 = arith.constant 0 : index
    %5 = vector.load %arg5[%c0_4, %c0_5, %c0_6] : memref<1x32x96xbf16, #tpu.memory_space<vmem>>, vector<1x32x96xbf16>
    %6 = vector.shape_cast %5 : vector<1x32x96xbf16> to vector<32x96xbf16>
    %cst = arith.constant dense<0.000000e+00> : vector<16x96xf32>
    %7 = tpu.matmul %4, %6, %cst {dimension_numbers = #tpu.dot_dimension_numbers<[1], [0], [0], [1], [0, 0, 1, 1], [], []>} : vector<16x32xbf16>, vector<32x96xbf16>, vector<16x96xf32> -> vector<16x96xf32>
    %8 = arith.addf %3, %7 : vector<16x96xf32>
    %c0_7 = arith.constant 0 : index
    %c0_8 = arith.constant 0 : index
    %9 = vector.load %arg8[%c0_7, %c0_8] : memref<16x96xf32, #tpu.memory_space<vmem>>, vector<16x96xf32>
    tpu.vector_store %arg8[%c0_7, %c0_8], %8 {strides = array<i32>} : memref<16x96xf32, #tpu.memory_space<vmem>>, vector<16x96xf32>,
    %c0_i32_9 = arith.constant 0 : i32
    %10 = arith.cmpi eq, %arg3, %c0_i32_9 : i32
    %11 = arith.extui %10 : i1 to i32
    %c0_i32_10 = arith.constant 0 : i32
    %12 = arith.cmpi ne, %11, %c0_i32_10 : i32
    scf.if %12 {
      %c0_11 = arith.constant 0 : index
      %c0_12 = arith.constant 0 : index
      %13 = vector.load %arg8[%c0_11, %c0_12] : memref<16x96xf32, #tpu.memory_space<vmem>>, vector<16x96xf32>
      %c0_13 = arith.constant 0 : index
      %c0_14 = arith.constant 0 : index
      %c0_15 = arith.constant 0 : index
      %14 = vector.load %arg6[%c0_13, %c0_14, %c0_15] : memref<1x1x96xf32, #tpu.memory_space<vmem>>, vector<1x1x96xf32>
      %15 = vector.shape_cast %14 : vector<1x1x96xf32> to vector<1x96xf32>
      %16 = vector.broadcast %15 : vector<1x96xf32> to vector<16x96xf32>
      %17 = arith.addf %13, %16 : vector<16x96xf32>
      %18 = arith.truncf %17 : vector<16x96xf32> to vector<16x96xbf16>
      %c0_16 = arith.constant 0 : index
      %c0_17 = arith.constant 0 : index
      %c0_18 = arith.constant 0 : index
      %19 = vector.load %arg7[%c0_16, %c0_17, %c0_18] : memref<1x16x96xbf16, #tpu.memory_space<vmem>>, vector<1x16x96xbf16>
      %20 = vector.shape_cast %19 : vector<1x16x96xbf16> to vector<16x96xbf16>
      %21 = vector.shape_cast %18 : vector<16x96xbf16> to vector<1x16x96xbf16>
      tpu.vector_store %arg7[%c0_16, %c0_17, %c0_18], %21 {strides = array<i32>} : memref<1x16x96xbf16, #tpu.memory_space<vmem>>, vector<1x16x96xbf16>,
    } else {
    }
    return
  }
  func.func @transform_0(%arg0: i32, %arg1: i32, %arg2: i32, %arg3: i32) -> (i32, i32) {
    %c0_i32 = arith.constant 0 : i32
    return %arg1, %arg3 : i32, i32
  }
  func.func @transform_1(%arg0: i32, %arg1: i32, %arg2: i32, %arg3: i32) -> (i32, i32, i32) {
    %c0_i32 = arith.constant 0 : i32
    return %arg0, %arg3, %arg2 : i32, i32, i32
  }
  func.func @transform_2(%arg0: i32, %arg1: i32, %arg2: i32, %arg3: i32) -> (i32, i32, i32) {
    %c0_i32 = arith.constant 0 : i32
    %c0_i32_0 = arith.constant 0 : i32
    return %arg0, %c0_i32, %arg2 : i32, i32, i32
  }
  func.func @transform_3(%arg0: i32, %arg1: i32, %arg2: i32, %arg3: i32) -> (i32, i32, i32) {
    %c0_i32 = arith.constant 0 : i32
    return %arg0, %arg1, %arg2 : i32, i32, i32
  }
}

</mosaic_0001>

<llo_original>
// kernel: tpu_custom_call.1
$region0: #{tpu_custom_call.1}
  #allocation0 [shape = 'u32[]', space=smem, size = 0x4, offset = 0x4, fixed_abs, tag = 'smem constant byte address 0x4 - core index']
  #allocation1 [shape = 'u32[144,128]{1,0:T(1,128)}', space=vmem, size = 0x12000, scoped, tag = 'internal scratch']
  #allocation2 [shape = 'f32[16,96]{1,0:T(8,128)}', space=vmem, size = 0x2000, scoped, tag = 'scratch operand']
  %s0 = inlined_call_operand.hbm [shape: bf16[16,32], index: 0, kind: input, shape index: {}]
  %s1 = inlined_call_operand.hbm [shape: bf16[2,32,96], index: 1, kind: input, shape index: {}]
  %s2 = inlined_call_operand.vmem [shape: f32[2,1,96], index: 2, kind: input, shape index: {}]
  %s3 = inlined_call_operand.hbm [shape: bf16[2,16,96], index: 3, kind: output, shape index: {}]
  %s4 = sld [smem:[#allocation0]]
  $region61: #{tpu_custom_call.1} parent=0
    _
  %s6 = ssub.s32 1, %s4
  %s7 = scalar_select 0, %s6, %s4
  $region1: #{tpu_custom_call.1} parent=0
    #allocation3 [shape = 'u8[4096]{0}', space=vmem, size = 0x1000, scoped, tag = 'input window, operand 0, single buffered']
    #allocation4 [shape = 's32[2]{0}', space=sflag, size = 0x8, scoped, tag = 'scoped memory for tpu_custom_call.1']
    #allocation5 [shape = 's32[2]{0}', space=sflag, size = 0x8, scoped, tag = 'scoped memory for tpu_custom_call.1']
    #allocation6 [shape = 'u8[16384]{0}', space=vmem, size = 0x4000, scoped, tag = 'input window, operand 1']
    #allocation7 [shape = 's32[2]{0}', space=sflag, size = 0x8, scoped, tag = 'scoped memory for tpu_custom_call.1']
    #allocation8 [shape = 'u8[8192]{0}', space=vmem, size = 0x2000, scoped, tag = 'output window, operand 0']
    %8 = vsyncpa [#allocation4], 0
    %9 = vsyncpa [#allocation7], 0
    %s10 = scalar_lea.sflag [#allocation7], 1
    %11 = vsyncpa %s10, 0
    %12 = vsyncpa [#allocation5], 0
    %s13 = scalar_lea.sflag [#allocation5], 1
    %14 = vsyncpa %s13, 0
    loop: start=0, step=1, limit=4
    $region2: #{tpu_custom_call.1} parent=1 // loop_pre_header
      _
    $region3: #{tpu_custom_call.1} parent=1 // loop_header
      %s16 = sphi 0, %s20
      %p17 = scmp.ge.s32.totalorder %s16, 4
      %s23 = sphi 0, %s49
      %s24 = sphi 0, %s45
      %s25 = sphi 0, %s41
      %s26 = sphi 0, %s37
      %s27 = sphi 0, %s23
      %s28 = sphi 0, %s24
      %s29 = sphi 0, %s25
      %s30 = sphi 0, %s26
      %s31 = sphi 0, %s27
      %s32 = sphi 0, %s28
      %s33 = sphi 0, %s29
      %s34 = sphi 0, %s30
      %s54 = sphi 0, %s56
      %s57 = sphi 0, %s54
      %s58 = sphi 0, %s57
      %s74 = sphi 0, %s58
      %s84 = sphi 0, %s86
      %s87 = sphi 0, %s84
      %s88 = sphi 0, %s87
      %s104 = sphi 0, %s88
      %s112 = sphi 0, %s114
      %s115 = sphi 0, %s112
      %s116 = sphi 0, %s115
      %s132 = sphi 0, %s116
      %s142 = sphi 0, %s144
      %s145 = sphi 0, %s142
      %s146 = sphi 0, %s145
      %s162 = sphi 0, %s146
    $region4: #{tpu_custom_call.1} parent=1 // loop_header_branch
      %19 = sbr.rel (%p17) target = $region8
    $region5: #{tpu_custom_call.1} parent=1 // loop_body
      %s21 = ssub.s32 %s16, 1
      %s22 = ssub.s32 %s16, 2
      %s35 = sadd.s32 1, %s26
      %p36 = scmp.ge.s32.totalorder %s35, 1
      %s37 = scalar_select %p36, 0, %s35
      %s38 = sadd.s32 1, %s25
      %s39 = scalar_select %p36, %s38, %s25
      %p40 = scmp.ge.s32.totalorder %s39, 1
      %s41 = scalar_select %p40, 0, %s39
      %s42 = sadd.s32 1, %s24
      %s43 = scalar_select %p40, %s42, %s24
      %p44 = scmp.ge.s32.totalorder %s43, 1
      %s45 = scalar_select %p44, 0, %s43
      %s46 = sadd.s32 1, %s23
      %s47 = scalar_select %p44, %s46, %s23
      %p48 = scmp.ge.s32.totalorder %s47, 2
      %s49 = scalar_select %p48, 0, %s47
      %s50 = ssub.s32 %s24, %s45
      %s51 = ssub.s32 %s26, %s37
      %s52 = sor.u32 %s50, %s51
      %p53 = scmp.eq.s32.totalorder %s52, 0
      %s55 = sadd.s32 %s54, 1
      %s56 = scalar_select %p53, %s54, %s55
      %p59 = pneg %p53
      %p60 = scmp.eq.s32.totalorder %s16, 1
      %p61 = por %p59, %p60
      %p62 = scmp.ne.s32.totalorder %s54, %s57
      %p63 = scmp.eq.s32.totalorder %s16, 0
      %p64 = por %p62, %p63
      %p65 = scmp.ne.s32.totalorder %s54, %s57
      %p66 = scmp.eq.s32.totalorder %s21, 1
      %p67 = por %p65, %p66
      %p68 = scmp.ne.s32.totalorder %s57, %s58
      %p69 = scmp.eq.s32.totalorder %s21, 0
      %p70 = por %p68, %p69
      %p71 = scmp.ne.s32.totalorder %s57, %s58
      %p72 = scmp.eq.s32.totalorder %s22, 1
      %p73 = por %p71, %p72
      %p75 = scmp.ne.s32.totalorder %s58, %s74
      %p76 = scmp.eq.s32.totalorder %s22, 0
      %p77 = por %p75, %p76
      %s78 = ssub.s32 %s23, %s49
      %s79 = ssub.s32 %s26, %s37
      %s80 = sor.u32 %s78, %s79
      %s81 = ssub.s32 %s25, %s41
      %s82 = sor.u32 %s80, %s81
      %p83 = scmp.eq.s32.totalorder %s82, 0
      %s85 = sadd.s32 %s84, 1
      %s86 = scalar_select %p83, %s84, %s85
      %p89 = pneg %p83
      %p90 = scmp.eq.s32.totalorder %s16, 1
      %p91 = por %p89, %p90
      %p92 = scmp.ne.s32.totalorder %s84, %s87
      %p93 = scmp.eq.s32.totalorder %s16, 0
      %p94 = por %p92, %p93
      %p95 = scmp.ne.s32.totalorder %s84, %s87
      %p96 = scmp.eq.s32.totalorder %s21, 1
      %p97 = por %p95, %p96
      %p98 = scmp.ne.s32.totalorder %s87, %s88
      %p99 = scmp.eq.s32.totalorder %s21, 0
      %p100 = por %p98, %p99
      %p101 = scmp.ne.s32.totalorder %s87, %s88
      %p102 = scmp.eq.s32.totalorder %s22, 1
      %p103 = por %p101, %p102
      %p105 = scmp.ne.s32.totalorder %s88, %s104
      %p106 = scmp.eq.s32.totalorder %s22, 0
      %p107 = por %p105, %p106
      %s108 = ssub.s32 %s23, %s49
      %s109 = ssub.s32 %s25, %s41
      %s110 = sor.u32 %s108, %s109
      %p111 = scmp.eq.s32.totalorder %s110, 0
      %s113 = sadd.s32 %s112, 1
      %s114 = scalar_select %p111, %s112, %s113
      %p117 = pneg %p111
      %p118 = scmp.eq.s32.totalorder %s16, 1
      %p119 = por %p117, %p118
      %p120 = scmp.ne.s32.totalorder %s112, %s115
      %p121 = scmp.eq.s32.totalorder %s16, 0
      %p122 = por %p120, %p121
      %p123 = scmp.ne.s32.totalorder %s112, %s115
      %p124 = scmp.eq.s32.totalorder %s21, 1
      %p125 = por %p123, %p124
      %p126 = scmp.ne.s32.totalorder %s115, %s116
      %p127 = scmp.eq.s32.totalorder %s21, 0
      %p128 = por %p126, %p127
      %p129 = scmp.ne.s32.totalorder %s115, %s116
      %p130 = scmp.eq.s32.totalorder %s22, 1
      %p131 = por %p129, %p130
      %p133 = scmp.ne.s32.totalorder %s116, %s132
      %p134 = scmp.eq.s32.totalorder %s22, 0
      %p135 = por %p133, %p134
      %s136 = ssub.s32 %s23, %s49
      %s137 = ssub.s32 %s24, %s45
      %s138 = sor.u32 %s136, %s137
      %s139 = ssub.s32 %s25, %s41
      %s140 = sor.u32 %s138, %s139
      %p141 = scmp.eq.s32.totalorder %s140, 0
      %s143 = sadd.s32 %s142, 1
      %s144 = scalar_select %p141, %s142, %s143
      %p147 = pneg %p141
      %p148 = scmp.eq.s32.totalorder %s16, 1
      %p149 = por %p147, %p148
      %p150 = scmp.ne.s32.totalorder %s142, %s145
      %p151 = scmp.eq.s32.totalorder %s16, 0
      %p152 = por %p150, %p151
      %p153 = scmp.ne.s32.totalorder %s142, %s145
      %p154 = scmp.eq.s32.totalorder %s21, 1
      %p155 = por %p153, %p154
      %p156 = scmp.ne.s32.totalorder %s145, %s146
      %p157 = scmp.eq.s32.totalorder %s21, 0
      %p158 = por %p156, %p157
      %p159 = scmp.ne.s32.totalorder %s145, %s146
      %p160 = scmp.eq.s32.totalorder %s22, 1
      %p161 = por %p159, %p160
      %p163 = scmp.ne.s32.totalorder %s146, %s162
      %p164 = scmp.eq.s32.totalorder %s22, 0
      %p165 = por %p163, %p164
      %p166 = scmp.le.s32.totalorder 1, %s16
      %p167 = scmp.lt.s32.totalorder %s16, 3
      %p168 = pnand %p166, %p167
      %p169 = pneg %p168
      // Predicated region
      $region9: #{tpu_custom_call.1} parent=5 // pred_check
        _
      $region10: #{tpu_custom_call.1} parent=5 // pred_check_branch
        %171 = sbr.rel (%p168) target = $region12
      $region11: #{tpu_custom_call.1} parent=5 // pred_region
        %s172 = ssub.s32 %s16, 1
        // Predicated region
        $region13: #{tpu_custom_call.1} parent=11 // pred_check
          %p173 = pneg %p70
        $region14: #{tpu_custom_call.1} parent=11 // pred_check_branch
          %175 = sbr.rel (%p173) target = $region16
        $region15: #{tpu_custom_call.1} parent=11 // pred_region
          %s176 = smul.u32 2, %s28
          %s178 = ssub.s32 128, 128
          %179 = vsyncadd [#allocation4], %s178
          %s180 = sadd.s32 %s30, %s176
          %s181 = smul.addr %s180, 64
          %s182 = scalar_lea.hbm %s0, %s181
          %s183 = sshll.u32 [#allocation3], 4
          %s184 = int_to_ptr.vmem [resolvable:$true] %s183
          %189 = dma.hbm_to_vmem [thread:$0]  %s182, 128, %s184, [#allocation4], 64, 64, 4
        $region16: #{tpu_custom_call.1} parent=11 // pred_fallthru
          _
      $region12: #{tpu_custom_call.1} parent=5 // pred_fallthru
        _
      %p190 = scmp.lt.s32.totalorder %s16, 2
      // Predicated region
      $region17: #{tpu_custom_call.1} parent=5 // pred_check
        %p191 = pneg %p190
      $region18: #{tpu_custom_call.1} parent=5 // pred_check_branch
        %193 = sbr.rel (%p191) target = $region20
      $region19: #{tpu_custom_call.1} parent=5 // pred_region
        // Predicated region
        $region21: #{tpu_custom_call.1} parent=19 // pred_check
          %p194 = pneg %p94
        $region22: #{tpu_custom_call.1} parent=19 // pred_check_branch
          %196 = sbr.rel (%p194) target = $region24
        $region23: #{tpu_custom_call.1} parent=19 // pred_region
          %s197 = sand.u32 %s84, 1
          %s198 = scalar_lea.sflag [#allocation7], %s197
          %s199 = sand.u32 %s84, 1
          %s200 = smul.addr %s199, 16
          %s201 = scalar_lea.vmem [#allocation6], %s200
          %s202 = smul.u32 4, %s26
          %s204 = ssub.s32 256, 256
          %205 = vsyncadd %s198, %s204
          %s206 = sadd.s32 %s25, %s202
          %s207 = smul.addr %s23, 4
          %s208 = sadd.s32 %s206, %s207
          %s209 = smul.addr %s208, 64
          %s210 = scalar_lea.hbm %s1, %s209
          %s211 = sshll.u32 %s201, 4
          %s212 = int_to_ptr.vmem [resolvable:$true] %s211
          %217 = dma.hbm_to_vmem [thread:$0]  %s210, 256, %s212, %s198, 64, 64, 4
        $region24: #{tpu_custom_call.1} parent=19 // pred_fallthru
          _
        // Predicated region
        $region25: #{tpu_custom_call.1} parent=19 // pred_check
          %p218 = pneg %p122
        $region26: #{tpu_custom_call.1} parent=19 // pred_check_branch
          %220 = sbr.rel (%p218) target = $region28
        $region27: #{tpu_custom_call.1} parent=19 // pred_region
          %p221 = scmp.lt.s32.totalorder %s23, 1
          %s222 = scalar_select %p221, %s23, 1
          %p223 = scmp.lt.s32.totalorder %s25, 0
          %s224 = scalar_select %p223, %s25, 0
          %s225 = sadd.s32 %s224, %s222
          %s226 = scalar_lea.vmem %s2, %s225
        $region28: #{tpu_custom_call.1} parent=19 // pred_fallthru
          _
      $region20: #{tpu_custom_call.1} parent=5 // pred_fallthru
        _
      %p227 = scmp.le.s32.totalorder 1, %s16
      %p228 = scmp.lt.s32.totalorder %s16, 3
      %p229 = pnand %p227, %p228
      %p230 = pneg %p229
      // Predicated region
      $region29: #{tpu_custom_call.1} parent=5 // pred_check
        _
      $region30: #{tpu_custom_call.1} parent=5 // pred_check_branch
        %232 = sbr.rel (%p229) target = $region32
      $region31: #{tpu_custom_call.1} parent=5 // pred_region
        %s233 = ssub.s32 %s16, 1
        // Predicated region
        $region33: #{tpu_custom_call.1} parent=31 // pred_check
          %p234 = pneg %p70
        $region34: #{tpu_custom_call.1} parent=31 // pred_check_branch
          %236 = sbr.rel (%p234) target = $region36
        $region35: #{tpu_custom_call.1} parent=31 // pred_region
          %237 = dma.done [#allocation4], 128
        $region36: #{tpu_custom_call.1} parent=31 // pred_fallthru
          _
        %s238 = sand.u32 %s87, 1
        %s239 = scalar_lea.sflag [#allocation7], %s238
        %s240 = sand.u32 %s87, 1
        %s241 = smul.addr %s240, 16
        %s242 = scalar_lea.vmem [#allocation6], %s241
        // Predicated region
        $region37: #{tpu_custom_call.1} parent=31 // pred_check
          %p243 = pneg %p100
        $region38: #{tpu_custom_call.1} parent=31 // pred_check_branch
          %245 = sbr.rel (%p243) target = $region40
        $region39: #{tpu_custom_call.1} parent=31 // pred_region
          %246 = dma.done %s239, 256
        $region40: #{tpu_custom_call.1} parent=31 // pred_fallthru
          _
        %p247 = pneg %p70
        %p248 = pneg %p67
        %s249 = sand.u32 %s87, 1
        %s250 = scalar_lea.sflag [#allocation7], %s249
        %s251 = sand.u32 %s87, 1
        %s252 = smul.addr %s251, 16
        %s253 = scalar_lea.vmem [#allocation6], %s252
        %p254 = pneg %p100
        %p255 = pneg %p97
        %p256 = scmp.lt.s32.totalorder %s27, 1
        %s257 = scalar_select %p256, %s27, 1
        %p258 = scmp.lt.s32.totalorder %s29, 0
        %s259 = scalar_select %p258, %s29, 0
        %s260 = sadd.s32 %s259, %s257
        %s261 = scalar_lea.vmem %s2, %s260
        %p262 = pneg %p128
        %p263 = pneg %p125
        %p264 = pneg %p158
        %p265 = pneg %p155
        %s266 = sand.u32 %s145, 1
        %s267 = scalar_lea.sflag [#allocation5], %s266
        %s268 = sand.u32 %s145, 1
        %s269 = smul.addr %s268, 8
        %s270 = scalar_lea.vmem [#allocation8], %s269
        %s271 = smul.u32 2, %s28
        %s272 = smul.u32 4, %s30
        %p273 = scmp.lt.s32.totalorder %s27, 1
        %s274 = scalar_select %p273, %s27, 1
        %p275 = scmp.lt.s32.totalorder %s29, 0
        %s276 = scalar_select %p275, %s29, 0
        %s277 = sadd.s32 %s276, %s274
        %s278 = scalar_lea.vmem %s2, %s277
        %s279 = smul.u32 2, %s28
        %p281 = scmp.eq.s32.totalorder %s30, 0
        // Predicated region
        $region41: #{tpu_custom_call.1} parent=31 // pred_check
          %p282 = pneg %p281
        $region42: #{tpu_custom_call.1} parent=31 // pred_check_branch
          %284 = sbr.rel (%p282) target = $region44
        $region43: #{tpu_custom_call.1} parent=31 // pred_region
          %vm285 = vcmask 785408
          %286 = vst.msk [vmem:[#allocation2] sm:$0xff] %vm285, 0.0
          %287 = vst.msk [vmem:[#allocation2 + $0x8] sm:$0xff] %vm285, 0.0
        $region44: #{tpu_custom_call.1} parent=31 // pred_fallthru
          _
        %v288 = vld [vmem:[#allocation2] sm:$0xff]
        %v289 = vld [vmem:[#allocation2 + $0x8] sm:$0xff]
        %v290 = vld [vmem:[#allocation3] sm:$0xf]
        %v291 = vld [vmem:[#allocation3 + $0x4] sm:$0xf]
        %v292 = vld [vmem:[%s242] sm:$0xf]
        %v293 = vld [vmem:[%s242 + $0x4] sm:$0xf]
        %v294 = vld [vmem:[%s242 + $0x8] sm:$0xf]
        %v295 = vld [vmem:[%s242 + $0xc] sm:$0xf]
        %v298 = vunpack.c.l.b16 %v290
        %v299 = vunpack.c.l.b16 %v291
        %v300 = vpack.c.b16 %v299, %v298
        %v305 = vunpack.c.l.b16 %v292
        %v306 = vunpack.c.l.b16 %v293
        %v307 = vunpack.c.l.b16 %v294
        %v308 = vunpack.c.l.b16 %v295
        %v309 = vpack.c.b16 %v306, %v305
        %v310 = vpack.c.b16 %v308, %v307
        %vm313 = vcmask 261120
        %v315 = vsel %vm313, %v300, 0
        %317 = vmatprep.subr.bf16.mxu0 0
        %318 = vmatpush1.bf16.msra.mxu0 0
        %319 = vmatprep.subr.bf16.mxu0 0
        %320 = vmatpush1.bf16.msra.mxu0 0
        %321 = vmatprep.subr.bf16.mxu0 0
        %322 = vmatpush1.bf16.msra.mxu0 0
        %323 = vmatprep.subr.bf16.mxu0 0
        %324 = vmatpush1.bf16.msra.mxu0 0
        %325 = vmatprep.subr.bf16.mxu0 0
        %326 = vmatpush1.bf16.msra.mxu0 0
        %327 = vmatprep.subr.bf16.mxu0 0
        %328 = vmatpush1.bf16.msra.mxu0 0
        %329 = vmatprep.subr.bf16.mxu0 0
        %330 = vmatpush1.bf16.msra.mxu0 %v310
        %331 = vmatprep.subr.bf16.mxu0 0
        %332 = vmatpush1.bf16.msra.mxu0 %v309
        %333 = vmatprep.subr.bf16.mxu0 0
        %334 = vmatpush2.bf16.msra.mxu0 0
        %335 = vmatprep.subr.bf16.mxu0 0
        %336 = vmatpush2.bf16.msra.mxu0 0
        %337 = vmatprep.subr.bf16.mxu0 0
        %338 = vmatpush2.bf16.msra.mxu0 0
        %339 = vmatprep.subr.bf16.mxu0 0
        %340 = vmatpush2.bf16.msra.mxu0 0
        %341 = vmatprep.subr.bf16.mxu0 0
        %342 = vmatpush2.bf16.msra.mxu0 0
        %343 = vmatprep.subr.bf16.mxu0 0
        %344 = vmatpush2.bf16.msra.mxu0 0
        %345 = vmatprep.subr.bf16.mxu0 0
        %346 = vmatpush2.bf16.msra.mxu0 0
        %347 = vmatprep.subr.bf16.mxu0 0
        %348 = vmatpush2.bf16.msra.mxu0 0
        %349 = vmatprep.mubr.bf16.mxu0 0
        %350 = vmatmul.mubr.bf16.gmra.mxu0 %v315
        %v351 = vpop.f32.mrf.mxu0
        %v352 = vadd.f32 0.0, %v351
        %v353 = vpop.f32.mrf.mxu0
        %v354 = vpop.f32.mrf.mxu0
        %v355 = vadd.f32 0.0, %v354
        %v356 = vpop.f32.mrf.mxu0
        %357 = vdwg.mxu0
        %v358 = vadd.f32 %v288, %v352
        %v359 = vadd.f32 %v289, %v355
        %vm360 = vcmask 785408
        %361 = vst.msk [vmem:[#allocation2] sm:$0xff] %vm360, %v358
        %362 = vst.msk [vmem:[#allocation2 + $0x8] sm:$0xff] %vm360, %v359
        // Predicated region
        $region45: #{tpu_custom_call.1} parent=31 // pred_check
          %p363 = pneg %p281
        $region46: #{tpu_custom_call.1} parent=31 // pred_check_branch
          %365 = sbr.rel (%p363) target = $region48
        $region47: #{tpu_custom_call.1} parent=31 // pred_region
          %v366 = vld [vmem:[#allocation2] sm:$0xff]
          %v367 = vld [vmem:[#allocation2 + $0x8] sm:$0xff]
          %v368 = vld [vmem:[%s278] sm:$0x1]
          %v370 = vlaneseq
          %v371 = vshrl.u32 %v370, 7
          %v372 = vsub.s32 0, %v371
          %v373 = vrot.slane %v368, %v372
          %v375 = vadd.f32 %v366, %v373
          %v376 = vadd.f32 %v367, %v373
          %v377 = vpack.c.bf16 %v376, %v375
          %v379 = vunpack.c.l.b16 %v377
          %v380 = vunpack.c.h.b16 %v377
          %v381 = vpack.c.b16 %v379, %v379
          %v382 = vpack.c.b16 %v380, %v380
          %vm385 = vcmask 781312
          %386 = vst.msk [vmem:[%s270] sm:$0xf] %vm385, %v381
          %387 = vst.msk [vmem:[%s270 + $0x4] sm:$0xf] %vm385, %v382
        $region48: #{tpu_custom_call.1} parent=31 // pred_fallthru
          _
        %s388 = sand.u32 %s145, 1
        %s389 = scalar_lea.sflag [#allocation5], %s388
        %s390 = sand.u32 %s145, 1
        %s391 = smul.addr %s390, 8
        %s392 = scalar_lea.vmem [#allocation8], %s391
        // Predicated region
        $region49: #{tpu_custom_call.1} parent=31 // pred_check
          %p393 = pneg %p155
        $region50: #{tpu_custom_call.1} parent=31 // pred_check_branch
          %395 = sbr.rel (%p393) target = $region52
        $region51: #{tpu_custom_call.1} parent=31 // pred_region
          %s396 = smul.u32 2, %s28
          %s398 = ssub.s32 128, 128
          %399 = vsyncadd %s389, %s398
          %s400 = sadd.s32 %s29, %s396
          %s401 = smul.addr %s27, 2
          %s402 = sadd.s32 %s400, %s401
          %s403 = smul.addr %s402, 64
          %s404 = scalar_lea.hbm %s3, %s403
          %s405 = sshll.u32 %s392, 4
          %s406 = int_to_ptr.vmem [resolvable:$true] %s405
          %411 = dma.vmem_to_hbm [thread:$0]  %s406, 128, %s404, %s389, 64, 64, 4
        $region52: #{tpu_custom_call.1} parent=31 // pred_fallthru
          _
      $region32: #{tpu_custom_call.1} parent=5 // pred_fallthru
        _
      %p412 = scmp.le.s32.totalorder 2, %s16
      // Predicated region
      $region53: #{tpu_custom_call.1} parent=5 // pred_check
        %p413 = pneg %p412
      $region54: #{tpu_custom_call.1} parent=5 // pred_check_branch
        %415 = sbr.rel (%p413) target = $region56
      $region55: #{tpu_custom_call.1} parent=5 // pred_region
        %s416 = ssub.s32 %s16, 2
        // Predicated region
        $region57: #{tpu_custom_call.1} parent=55 // pred_check
          %p417 = pneg %p161
        $region58: #{tpu_custom_call.1} parent=55 // pred_check_branch
          %419 = sbr.rel (%p417) target = $region60
        $region59: #{tpu_custom_call.1} parent=55 // pred_region
          %s420 = sand.u32 %s146, 1
          %s421 = scalar_lea.sflag [#allocation5], %s420
          %s422 = sand.u32 %s146, 1
          %s423 = smul.addr %s422, 8
          %s424 = scalar_lea.vmem [#allocation8], %s423
          %425 = dma.done %s421, 128
        $region60: #{tpu_custom_call.1} parent=55 // pred_fallthru
          _
      $region56: #{tpu_custom_call.1} parent=5 // pred_fallthru
        _
    $region6: #{tpu_custom_call.1} parent=1 // loop_footer
      %s20 = sadd.s32 1, %s16
    $region7: #{tpu_custom_call.1} parent=1 // loop_footer_branch
      %15 = sbr.rel target = $region3
    $region8: #{tpu_custom_call.1} parent=1 // loop_exit
      _
    %426 = vsyncpa [#allocation4], 1
    %s427 = scalar_lea.sflag [#allocation4], 1
    %428 = vsyncpa %s427, 1
    %429 = vsyncpa [#allocation7], 1
    %s430 = scalar_lea.sflag [#allocation7], 1
    %431 = vsyncpa %s430, 1
    %432 = vsyncpa [#allocation5], 1
    %s433 = scalar_lea.sflag [#allocation5], 1
    %434 = vsyncpa %s433, 1

</llo_original>
